<compile_context>
chip_gen: v7x
topology: tpu7x:2x2x1
jax: 0.10.0
libtpu: 0.0.40
codegen_flags: <defaults>
</compile_context>

<pallas_src>
import functools

import jax
import jax.numpy as jnp
from jax.experimental import pallas as pl
from jax.experimental.pallas import tpu as pltpu


def _round_up(a, m):
    return (a + m - 1) // m * m


@functools.lru_cache(maxsize=None)
def _sqrt_alpha_bar_tables(n_steps, min_beta, max_beta):
    """Precompute sqrt(alpha_bar) and sqrt(1 - alpha_bar) tables (f32)."""
    betas = jnp.linspace(min_beta, max_beta, n_steps, dtype=jnp.float32)
    alpha_bar = jnp.cumprod(1.0 - betas)
    return jnp.sqrt(alpha_bar), jnp.sqrt(1.0 - alpha_bar)


def _choose_tiles(n, d, itemsize):
    """Pick (TN, TD): lane-dense 128-multiple columns, packing-aligned rows,
    ~2 MiB per data tile so 3 streams x 2 buffers fits every generation's
    scoped-VMEM default (v5e 16 MiB, v6e/v7x 32 MiB)."""
    pack = {4: 8, 2: 16, 1: 32}.get(itemsize, 8)
    td = min(_round_up(d, 128), 8192)

    budget = 2 * 1024 * 1024  # bytes per data tile
    max_tn = max(pack, (budget // (td * itemsize)) // pack * pack)
    tn = max(pack, min(max_tn, 256, _round_up(n, pack)))

    # Keep the grid splittable across v7x's two TensorCores when possible.
    if (pl.cdiv(n, tn) * pl.cdiv(d, td)) < 2:
        if n > pack:
            tn = max(pack, _round_up(pl.cdiv(n, 2), pack))
        elif d > 128:
            td = max(128, _round_up(pl.cdiv(d, 2), 128))
    return tn, td


def _ddpm_forward_kernel(sab_ref, s1mab_ref, x_ref, eta_ref, o_ref):
    # (TN, 1) f32 scales broadcast against (TN, TD) data tiles on the VPU;
    # compute in f32, cast only at the store. Purely HBM-bound.
    out = sab_ref[...] * x_ref[...] + s1mab_ref[...] * eta_ref[...]
    o_ref[...] = out.astype(o_ref.dtype)


def ddpm_forward(x, t, eta, *, n_steps=1000, min_beta=1e-4, max_beta=0.02,
                 use_pallas=None):
    """DDPM.forward: sqrt(alpha_bar[t]) * x + sqrt(1 - alpha_bar[t]) * eta."""
    n, c, h, w = x.shape
    d = c * h * w
    dtype = x.dtype
    itemsize = jnp.dtype(dtype).itemsize

    sab_tab, s1mab_tab = _sqrt_alpha_bar_tables(
        int(n_steps), float(min_beta), float(max_beta))
    sqrt_ab = sab_tab[t].reshape(n, 1)       # (n, 1) f32
    sqrt_1mab = s1mab_tab[t].reshape(n, 1)   # (n, 1) f32

    x_flat = x.reshape(n, d)
    eta_flat = eta.reshape(n, d)

    if use_pallas is None:
        # Tiny inputs: a single fused XLA elementwise op beats any custom call.
        use_pallas = n * d * itemsize >= (1 << 20)

    if not use_pallas:
        out_flat = (sqrt_ab * x_flat + sqrt_1mab * eta_flat).astype(dtype)
        return out_flat.reshape(n, c, h, w)

    TN, TD = _choose_tiles(n, d, itemsize)
    grid = (pl.cdiv(n, TN), pl.cdiv(d, TD))

    out_flat = pl.pallas_call(
        _ddpm_forward_kernel,
        out_shape=jax.ShapeDtypeStruct((n, d), dtype),
        grid=grid,
        in_specs=[
            pl.BlockSpec((TN, 1), lambda i, j: (i, 0)),    # sqrt(alpha_bar[t])
            pl.BlockSpec((TN, 1), lambda i, j: (i, 0)),    # sqrt(1 - alpha_bar[t])
            pl.BlockSpec((TN, TD), lambda i, j: (i, j)),   # x tile
            pl.BlockSpec((TN, TD), lambda i, j: (i, j)),   # eta tile
        ],
        out_specs=pl.BlockSpec((TN, TD), lambda i, j: (i, j)),
        compiler_params=pltpu.CompilerParams(
            dimension_semantics=("parallel", "parallel")),
        cost_estimate=pl.CostEstimate(
            flops=3 * n * d,
            transcendentals=0,
            bytes_accessed=3 * n * d * itemsize),
    )(sqrt_ab, sqrt_1mab, x_flat, eta_flat)

    return out_flat.reshape(n, c, h, w)


if __name__ == "__main__":
    key = jax.random.PRNGKey(0)
    kx, ke, kt = jax.random.split(key, 3)

    N, C, H, W = 2, 4, 16, 16
    n_steps = 1000
    x = jax.random.normal(kx, (N, C, H, W), dtype=jnp.float32)
    eta = jax.random.normal(ke, (N, C, H, W), dtype=jnp.float32)
    t = jax.random.randint(kt, (N,), 0, n_steps, dtype=jnp.int32)

    # Pure-JAX reference.
    betas = jnp.linspace(1e-4, 0.02, n_steps, dtype=jnp.float32)
    alpha_bar = jnp.cumprod(1.0 - betas)
    ab = alpha_bar[t]
    ref = (jnp.sqrt(ab).reshape(N, 1, 1, 1) * x
           + jnp.sqrt(1.0 - ab).reshape(N, 1, 1, 1) * eta)

    # 1) Force the Pallas path so the kernel is exercised even at this size.
    out_pallas = jax.block_until_ready(
        ddpm_forward(x, t, eta, n_steps=n_steps, use_pallas=True))
    assert out_pallas.shape == (N, C, H, W)
    assert out_pallas.dtype == x.dtype
    assert jnp.allclose(out_pallas, ref, atol=1e-6, rtol=1e-6)

    # 2) Default auto-routing (this tiny shape takes the fused-XLA path).
    out_auto = jax.block_until_ready(ddpm_forward(x, t, eta, n_steps=n_steps))
    assert jnp.allclose(out_auto, ref, atol=1e-6, rtol=1e-6)

    print("KERNEL_OK")
</pallas_src>

<mosaic_0001>
module attributes {stable_mosaic.version = 11 : i64} {
  func.func @_ddpm_forward_kernel(%arg0: i32, %arg1: i32, %arg2: memref<8x1xf32, #tpu.memory_space<vmem>>, %arg3: memref<8x1xf32, #tpu.memory_space<vmem>>, %arg4: memref<8x512xf32, #tpu.memory_space<vmem>>, %arg5: memref<8x512xf32, #tpu.memory_space<vmem>>, %arg6: memref<8x512xf32, #tpu.memory_space<vmem>>) attributes {dimension_semantics = [#tpu.dimension_semantics<parallel>, #tpu.dimension_semantics<parallel>], iteration_bounds = array<i64: 1, 2>, scalar_prefetch = 0 : i64, scratch_operands = 0 : i64, tpu.core_type = #tpu.core_type<tc>, window_params = [{transform_indices = @transform_0, window_bounds = array<i64: 8, 1>}, {transform_indices = @transform_1, window_bounds = array<i64: 8, 1>}, {transform_indices = @transform_2, window_bounds = array<i64: 8, 512>}, {transform_indices = @transform_3, window_bounds = array<i64: 8, 512>}, {transform_indices = @transform_4, window_bounds = array<i64: 8, 512>}]} {
    %c0 = arith.constant 0 : index
    %c0_0 = arith.constant 0 : index
    %0 = vector.load %arg2[%c0, %c0_0] : memref<8x1xf32, #tpu.memory_space<vmem>>, vector<8x1xf32>
    %c0_1 = arith.constant 0 : index
    %c0_2 = arith.constant 0 : index
    %1 = vector.load %arg4[%c0_1, %c0_2] : memref<8x512xf32, #tpu.memory_space<vmem>>, vector<8x512xf32>
    %2 = vector.broadcast %0 : vector<8x1xf32> to vector<8x512xf32>
    %3 = arith.mulf %2, %1 : vector<8x512xf32>
    %c0_3 = arith.constant 0 : index
    %c0_4 = arith.constant 0 : index
    %4 = vector.load %arg3[%c0_3, %c0_4] : memref<8x1xf32, #tpu.memory_space<vmem>>, vector<8x1xf32>
    %c0_5 = arith.constant 0 : index
    %c0_6 = arith.constant 0 : index
    %5 = vector.load %arg5[%c0_5, %c0_6] : memref<8x512xf32, #tpu.memory_space<vmem>>, vector<8x512xf32>
    %6 = vector.broadcast %4 : vector<8x1xf32> to vector<8x512xf32>
    %7 = arith.mulf %6, %5 : vector<8x512xf32>
    %8 = arith.addf %3, %7 : vector<8x512xf32>
    %c0_7 = arith.constant 0 : index
    %c0_8 = arith.constant 0 : index
    %9 = vector.load %arg6[%c0_7, %c0_8] : memref<8x512xf32, #tpu.memory_space<vmem>>, vector<8x512xf32>
    tpu.vector_store %arg6[%c0_7, %c0_8], %8 {strides = array<i32>} : memref<8x512xf32, #tpu.memory_space<vmem>>, vector<8x512xf32>,
    return
  }
  func.func @transform_0(%arg0: i32, %arg1: i32) -> (i32, i32) {
    %c0_i32 = arith.constant 0 : i32
    %c0_i32_0 = arith.constant 0 : i32
    return %arg0, %c0_i32 : i32, i32
  }
  func.func @transform_1(%arg0: i32, %arg1: i32) -> (i32, i32) {
    %c0_i32 = arith.constant 0 : i32
    %c0_i32_0 = arith.constant 0 : i32
    return %arg0, %c0_i32 : i32, i32
  }
  func.func @transform_2(%arg0: i32, %arg1: i32) -> (i32, i32) {
    %c0_i32 = arith.constant 0 : i32
    return %arg0, %arg1 : i32, i32
  }
  func.func @transform_3(%arg0: i32, %arg1: i32) -> (i32, i32) {
    %c0_i32 = arith.constant 0 : i32
    return %arg0, %arg1 : i32, i32
  }
  func.func @transform_4(%arg0: i32, %arg1: i32) -> (i32, i32) {
    %c0_i32 = arith.constant 0 : i32
    return %arg0, %arg1 : i32, i32
  }
}

</mosaic_0001>

<llo_original>
// kernel: tpu_custom_call.1
$region0: #{tpu_custom_call.1}
  #allocation0 [shape = 'u32[]', space=smem, size = 0x4, offset = 0x4, fixed_abs, tag = 'smem constant byte address 0x4 - core index']
  #allocation1 [shape = 'u32[144,128]{1,0:T(1,128)}', space=vmem, size = 0x12000, scoped, tag = 'internal scratch']
  %s0 = inlined_call_operand.vmem [shape: f32[2,1], index: 0, kind: input, shape index: {}]
  %s1 = inlined_call_operand.vmem [shape: f32[2,1], index: 1, kind: input, shape index: {}]
  %s2 = inlined_call_operand.hbm [shape: f32[2,1024], index: 2, kind: input, shape index: {}]
  %s3 = inlined_call_operand.vmem [shape: f32[2,1024], index: 3, kind: input, shape index: {}]
  %s4 = inlined_call_operand.hbm [shape: f32[2,1024], index: 4, kind: output, shape index: {}]
  %s5 = sld [smem:[#allocation0]]
  $region91: #{tpu_custom_call.1} parent=0
    _
  %s7 = ssub.s32 1, %s5
  %s8 = scalar_select 0, %s7, %s5
  $region1: #{tpu_custom_call.1} parent=0
    #allocation2 [shape = 'u8[32768]{0}', space=vmem, size = 0x8000, scoped, tag = 'input window, operand 2']
    #allocation3 [shape = 's32[2]{0}', space=sflag, size = 0x8, scoped, tag = 'scoped memory for tpu_custom_call.1']
    #allocation4 [shape = 's32[2]{0}', space=sflag, size = 0x8, scoped, tag = 'scoped memory for tpu_custom_call.1']
    #allocation5 [shape = 'u8[32768]{0}', space=vmem, size = 0x8000, scoped, tag = 'input window, operand 3']
    #allocation6 [shape = 'u8[32768]{0}', space=vmem, size = 0x8000, scoped, tag = 'output window, operand 0']
    %9 = vsyncpa [#allocation3], 0
    %s10 = scalar_lea.sflag [#allocation3], 1
    %11 = vsyncpa %s10, 0
    %12 = vsyncpa [#allocation4], 0
    %s13 = scalar_lea.sflag [#allocation4], 1
    %14 = vsyncpa %s13, 0
    loop: start=0, step=1, limit=4
    $region2: #{tpu_custom_call.1} parent=1 // loop_pre_header
      _
    $region3: #{tpu_custom_call.1} parent=1 // loop_header
      %s16 = sphi 0, %s20
      %p17 = scmp.ge.s32.totalorder %s16, 4
      %s23 = sphi 0, %s35
      %s24 = sphi 0, %s31
      %s25 = sphi 0, %s23
      %s26 = sphi 0, %s24
      %s27 = sphi 0, %s25
      %s28 = sphi 0, %s26
      %s38 = sphi 0, %s40
      %s41 = sphi 0, %s38
      %s42 = sphi 0, %s41
      %s58 = sphi 0, %s42
      %s64 = sphi 0, %s66
      %s67 = sphi 0, %s64
      %s68 = sphi 0, %s67
      %s84 = sphi 0, %s68
      %s92 = sphi 0, %s94
      %s95 = sphi 0, %s92
      %s96 = sphi 0, %s95
      %s112 = sphi 0, %s96
      %s120 = sphi 0, %s122
      %s123 = sphi 0, %s120
      %s124 = sphi 0, %s123
      %s140 = sphi 0, %s124
      %s148 = sphi 0, %s150
      %s151 = sphi 0, %s148
      %s152 = sphi 0, %s151
      %s168 = sphi 0, %s152
    $region4: #{tpu_custom_call.1} parent=1 // loop_header_branch
      %19 = sbr.rel (%p17) target = $region8
    $region5: #{tpu_custom_call.1} parent=1 // loop_body
      %s21 = ssub.s32 %s16, 1
      %s22 = ssub.s32 %s16, 2
      %s29 = sadd.s32 1, %s24
      %p30 = scmp.ge.s32.totalorder %s29, 2
      %s31 = scalar_select %p30, 0, %s29
      %s32 = sadd.s32 1, %s23
      %s33 = scalar_select %p30, %s32, %s23
      %p34 = scmp.ge.s32.totalorder %s33, 1
      %s35 = scalar_select %p34, 0, %s33
      %s36 = ssub.s32 %s23, %s35
      %p37 = scmp.eq.s32.totalorder %s36, 0
      %s39 = sadd.s32 %s38, 1
      %s40 = scalar_select %p37, %s38, %s39
      %p43 = pneg %p37
      %p44 = scmp.eq.s32.totalorder %s16, 1
      %p45 = por %p43, %p44
      %p46 = scmp.ne.s32.totalorder %s38, %s41
      %p47 = scmp.eq.s32.totalorder %s16, 0
      %p48 = por %p46, %p47
      %p49 = scmp.ne.s32.totalorder %s38, %s41
      %p50 = scmp.eq.s32.totalorder %s21, 1
      %p51 = por %p49, %p50
      %p52 = scmp.ne.s32.totalorder %s41, %s42
      %p53 = scmp.eq.s32.totalorder %s21, 0
      %p54 = por %p52, %p53
      %p55 = scmp.ne.s32.totalorder %s41, %s42
      %p56 = scmp.eq.s32.totalorder %s22, 1
      %p57 = por %p55, %p56
      %p59 = scmp.ne.s32.totalorder %s42, %s58
      %p60 = scmp.eq.s32.totalorder %s22, 0
      %p61 = por %p59, %p60
      %s62 = ssub.s32 %s23, %s35
      %p63 = scmp.eq.s32.totalorder %s62, 0
      %s65 = sadd.s32 %s64, 1
      %s66 = scalar_select %p63, %s64, %s65
      %p69 = pneg %p63
      %p70 = scmp.eq.s32.totalorder %s16, 1
      %p71 = por %p69, %p70
      %p72 = scmp.ne.s32.totalorder %s64, %s67
      %p73 = scmp.eq.s32.totalorder %s16, 0
      %p74 = por %p72, %p73
      %p75 = scmp.ne.s32.totalorder %s64, %s67
      %p76 = scmp.eq.s32.totalorder %s21, 1
      %p77 = por %p75, %p76
      %p78 = scmp.ne.s32.totalorder %s67, %s68
      %p79 = scmp.eq.s32.totalorder %s21, 0
      %p80 = por %p78, %p79
      %p81 = scmp.ne.s32.totalorder %s67, %s68
      %p82 = scmp.eq.s32.totalorder %s22, 1
      %p83 = por %p81, %p82
      %p85 = scmp.ne.s32.totalorder %s68, %s84
      %p86 = scmp.eq.s32.totalorder %s22, 0
      %p87 = por %p85, %p86
      %s88 = ssub.s32 %s23, %s35
      %s89 = ssub.s32 %s24, %s31
      %s90 = sor.u32 %s88, %s89
      %p91 = scmp.eq.s32.totalorder %s90, 0
      %s93 = sadd.s32 %s92, 1
      %s94 = scalar_select %p91, %s92, %s93
      %p97 = pneg %p91
      %p98 = scmp.eq.s32.totalorder %s16, 1
      %p99 = por %p97, %p98
      %p100 = scmp.ne.s32.totalorder %s92, %s95
      %p101 = scmp.eq.s32.totalorder %s16, 0
      %p102 = por %p100, %p101
      %p103 = scmp.ne.s32.totalorder %s92, %s95
      %p104 = scmp.eq.s32.totalorder %s21, 1
      %p105 = por %p103, %p104
      %p106 = scmp.ne.s32.totalorder %s95, %s96
      %p107 = scmp.eq.s32.totalorder %s21, 0
      %p108 = por %p106, %p107
      %p109 = scmp.ne.s32.totalorder %s95, %s96
      %p110 = scmp.eq.s32.totalorder %s22, 1
      %p111 = por %p109, %p110
      %p113 = scmp.ne.s32.totalorder %s96, %s112
      %p114 = scmp.eq.s32.totalorder %s22, 0
      %p115 = por %p113, %p114
      %s116 = ssub.s32 %s23, %s35
      %s117 = ssub.s32 %s24, %s31
      %s118 = sor.u32 %s116, %s117
      %p119 = scmp.eq.s32.totalorder %s118, 0
      %s121 = sadd.s32 %s120, 1
      %s122 = scalar_select %p119, %s120, %s121
      %p125 = pneg %p119
      %p126 = scmp.eq.s32.totalorder %s16, 1
      %p127 = por %p125, %p126
      %p128 = scmp.ne.s32.totalorder %s120, %s123
      %p129 = scmp.eq.s32.totalorder %s16, 0
      %p130 = por %p128, %p129
      %p131 = scmp.ne.s32.totalorder %s120, %s123
      %p132 = scmp.eq.s32.totalorder %s21, 1
      %p133 = por %p131, %p132
      %p134 = scmp.ne.s32.totalorder %s123, %s124
      %p135 = scmp.eq.s32.totalorder %s21, 0
      %p136 = por %p134, %p135
      %p137 = scmp.ne.s32.totalorder %s123, %s124
      %p138 = scmp.eq.s32.totalorder %s22, 1
      %p139 = por %p137, %p138
      %p141 = scmp.ne.s32.totalorder %s124, %s140
      %p142 = scmp.eq.s32.totalorder %s22, 0
      %p143 = por %p141, %p142
      %s144 = ssub.s32 %s23, %s35
      %s145 = ssub.s32 %s24, %s31
      %s146 = sor.u32 %s144, %s145
      %p147 = scmp.eq.s32.totalorder %s146, 0
      %s149 = sadd.s32 %s148, 1
      %s150 = scalar_select %p147, %s148, %s149
      %p153 = pneg %p147
      %p154 = scmp.eq.s32.totalorder %s16, 1
      %p155 = por %p153, %p154
      %p156 = scmp.ne.s32.totalorder %s148, %s151
      %p157 = scmp.eq.s32.totalorder %s16, 0
      %p158 = por %p156, %p157
      %p159 = scmp.ne.s32.totalorder %s148, %s151
      %p160 = scmp.eq.s32.totalorder %s21, 1
      %p161 = por %p159, %p160
      %p162 = scmp.ne.s32.totalorder %s151, %s152
      %p163 = scmp.eq.s32.totalorder %s21, 0
      %p164 = por %p162, %p163
      %p165 = scmp.ne.s32.totalorder %s151, %s152
      %p166 = scmp.eq.s32.totalorder %s22, 1
      %p167 = por %p165, %p166
      %p169 = scmp.ne.s32.totalorder %s152, %s168
      %p170 = scmp.eq.s32.totalorder %s22, 0
      %p171 = por %p169, %p170
      %p172 = scmp.le.s32.totalorder 1, %s16
      %p173 = scmp.lt.s32.totalorder %s16, 3
      %p174 = pnand %p172, %p173
      %p175 = pneg %p174
      // Predicated region
      $region9: #{tpu_custom_call.1} parent=5 // pred_check
        _
      $region10: #{tpu_custom_call.1} parent=5 // pred_check_branch
        %177 = sbr.rel (%p174) target = $region12
      $region11: #{tpu_custom_call.1} parent=5 // pred_region
        %s178 = ssub.s32 %s16, 1
        // Predicated region
        $region13: #{tpu_custom_call.1} parent=11 // pred_check
          %p179 = pneg %p54
        $region14: #{tpu_custom_call.1} parent=11 // pred_check_branch
          %181 = sbr.rel (%p179) target = $region16
        $region15: #{tpu_custom_call.1} parent=11 // pred_region
          %s182 = smul.u32 4, %s25
          %s183 = ssub.s32 1, %s182
          %s184 = smul.u32 32, %s183
          %p185 = scmp.lt.s32.totalorder %s182, 0
          %s186 = scalar_select %p185, %s182, 0
          %s187 = smul.addr %s186, 2
          %s188 = scalar_lea.vmem %s0, %s187
          %s189 = smul.u32 4, %s25
          %s190 = ssub.s32 1, %s189
          %s191 = smul.u32 32, %s190
        $region16: #{tpu_custom_call.1} parent=11 // pred_fallthru
          _
        // Predicated region
        $region17: #{tpu_custom_call.1} parent=11 // pred_check
          %p192 = pneg %p80
        $region18: #{tpu_custom_call.1} parent=11 // pred_check_branch
          %194 = sbr.rel (%p192) target = $region20
        $region19: #{tpu_custom_call.1} parent=11 // pred_region
          %s195 = smul.u32 4, %s25
          %s196 = ssub.s32 1, %s195
          %s197 = smul.u32 32, %s196
          %p198 = scmp.lt.s32.totalorder %s195, 0
          %s199 = scalar_select %p198, %s195, 0
          %s200 = smul.addr %s199, 2
          %s201 = scalar_lea.vmem %s1, %s200
          %s202 = smul.u32 4, %s25
          %s203 = ssub.s32 1, %s202
          %s204 = smul.u32 32, %s203
        $region20: #{tpu_custom_call.1} parent=11 // pred_fallthru
          _
      $region12: #{tpu_custom_call.1} parent=5 // pred_fallthru
        _
      %p205 = scmp.lt.s32.totalorder %s16, 2
      // Predicated region
      $region21: #{tpu_custom_call.1} parent=5 // pred_check
        %p206 = pneg %p205
      $region22: #{tpu_custom_call.1} parent=5 // pred_check_branch
        %208 = sbr.rel (%p206) target = $region24
      $region23: #{tpu_custom_call.1} parent=5 // pred_region
        // Predicated region
        $region25: #{tpu_custom_call.1} parent=23 // pred_check
          %p209 = pneg %p102
        $region26: #{tpu_custom_call.1} parent=23 // pred_check_branch
          %211 = sbr.rel (%p209) target = $region28
        $region27: #{tpu_custom_call.1} parent=23 // pred_region
          %s212 = sand.u32 %s92, 1
          %s213 = scalar_lea.sflag [#allocation3], %s212
          %s214 = sand.u32 %s92, 1
          %s215 = smul.addr %s214, 32
          %s216 = scalar_lea.vmem [#allocation2], %s215
          %s217 = smul.u32 4, %s23
          %s218 = smul.u32 4, %s24
          %s219 = ssub.s32 1, %s217
          %s220 = smul.u32 32, %s219
          %s221 = smul.u32 %s220, 4
          %s223 = ssub.s32 512, %s221
          %224 = vsyncadd %s213, %s223
          %p225 = scmp.ne.s32.totalorder 0, %s221
          %s226 = smul.addr %s217, 8
          %s227 = sadd.s32 %s218, %s226
          %s228 = smul.addr %s227, 32
          %s229 = scalar_lea.hbm %s2, %s228
          %s230 = smul.u32 8, %s219
          %s231 = sshll.u32 %s216, 4
          %s232 = int_to_ptr.vmem [resolvable:$true] %s231
          %s233 = sshll.u32 %s230, 4
          %237 = dma.hbm_to_vmem [thread:$0]  (%p225), %s229, %s233, %s232, %s213, 256, 128, 8
        $region28: #{tpu_custom_call.1} parent=23 // pred_fallthru
          _
        // Predicated region
        $region29: #{tpu_custom_call.1} parent=23 // pred_check
          %p238 = pneg %p130
        $region30: #{tpu_custom_call.1} parent=23 // pred_check_branch
          %240 = sbr.rel (%p238) target = $region32
        $region31: #{tpu_custom_call.1} parent=23 // pred_region
          %s241 = sand.u32 %s120, 1
          %s242 = sand.u32 %s120, 1
          %s243 = smul.addr %s242, 32
          %s244 = scalar_lea.vmem [#allocation5], %s243
          %s245 = smul.u32 4, %s23
          %s246 = smul.u32 4, %s24
          %s247 = ssub.s32 1, %s245
          %s248 = smul.u32 32, %s247
          %s249 = smul.u32 %s248, 4
          %p250 = scmp.ne.s32.totalorder 0, %s249
          %s251 = smul.addr %s245, 8
          %s252 = sadd.s32 %s246, %s251
          %s253 = smul.addr %s252, 2
          %s254 = scalar_lea.vmem %s3, %s253
          // Predicated region
          $region33: #{tpu_custom_call.1} parent=31 // pred_check
            %p255 = pneg %p250
          $region34: #{tpu_custom_call.1} parent=31 // pred_check_branch
            %257 = sbr.rel (%p255) target = $region36
          $region35: #{tpu_custom_call.1} parent=31 // pred_region
            // Predicated region
            $region37: #{tpu_custom_call.1} parent=35 // pred_check
              _
            $region38: #{tpu_custom_call.1} parent=35 // pred_check_branch
              %259 = sbr.rel (0) target = $region40
            $region39: #{tpu_custom_call.1} parent=35 // pred_region
              // Predicated region
              $region52: #{tpu_custom_call.1} parent=39 // pred_check
                _
              $region53: #{tpu_custom_call.1} parent=39 // pred_check_branch
                %282 = sbr.rel (0) target = $region55
              $region54: #{tpu_custom_call.1} parent=39 // pred_region
                // While loop
                $region56: #{tpu_custom_call.1} parent=54 // loop_pre_header
                  _
                $region57: #{tpu_custom_call.1} parent=54 // loop_header
                  %s284 = sphi 0, %s286
                  %p285 = scmp.ge.s32.totalorder %s284, %s247
                  %s289 = sphi 0, %s296
                  %s290 = sphi %s254, %s299
                  %s291 = sphi %s244, %s300
                $region58: #{tpu_custom_call.1} parent=54 // loop_header_branch
                  %288 = sbr.rel (%p285) target = $region62
                $region59: #{tpu_custom_call.1} parent=54 // loop_body
                  %v292 = vld [vmem:[%s290] sm:$0xff]
                  %293 = vst [vmem:[%s291] sm:$0xff] %v292
                  %s294 = sadd.s32 1, %s289
                  %p295 = scmp.ge.s32.totalorder %s294, %s247
                  %s296 = scalar_select %p295, 0, %s294
                  %s297 = smul.u32 %s296, 16
                  %s298 = smul.u32 %s296, 8
                  %s299 = scalar_lea.vmem %s254, %s297
                  %s300 = scalar_lea.vmem %s244, %s298 [#allocation5]
                $region60: #{tpu_custom_call.1} parent=54 // loop_footer
                  %s286 = sadd.s32 %s284, 1
                $region61: #{tpu_custom_call.1} parent=54 // loop_footer_branch
                  %283 = sbr.rel target = $region57
                $region62: #{tpu_custom_call.1} parent=54 // loop_exit
                  _
              $region55: #{tpu_custom_call.1} parent=39 // pred_fallthru
                _
              // Predicated region
              $region63: #{tpu_custom_call.1} parent=39 // pred_check
                _
              $region64: #{tpu_custom_call.1} parent=39 // pred_check_branch
                %302 = sbr.rel target = $region66
              $region65: #{tpu_custom_call.1} parent=39 // pred_region
                _
              $region66: #{tpu_custom_call.1} parent=39 // pred_fallthru
                _
            $region40: #{tpu_custom_call.1} parent=35 // pred_fallthru
              _
            // Predicated region
            $region41: #{tpu_custom_call.1} parent=35 // pred_check
              _
            $region42: #{tpu_custom_call.1} parent=35 // pred_check_branch
              %261 = sbr.rel target = $region44
            $region43: #{tpu_custom_call.1} parent=35 // pred_region
              // While loop
              $region45: #{tpu_custom_call.1} parent=43 // loop_pre_header
                _
              $region46: #{tpu_custom_call.1} parent=43 // loop_header
                %s264 = sphi 0, %s266
                %p265 = scmp.ge.s32.totalorder %s264, %s247
                %s269 = sphi 0, %s276
                %s270 = sphi %s254, %s279
                %s271 = sphi %s244, %s280
              $region47: #{tpu_custom_call.1} parent=43 // loop_header_branch
                %268 = sbr.rel (%p265) target = $region51
              $region48: #{tpu_custom_call.1} parent=43 // loop_body
                %v272 = vld [vmem:[%s270] sm:$0xff]
                %273 = vst [vmem:[%s271] sm:$0xff] %v272
                %s274 = sadd.s32 1, %s269
                %p275 = scmp.ge.s32.totalorder %s274, %s247
                %s276 = scalar_select %p275, 0, %s274
                %s277 = smul.u32 %s276, 16
                %s278 = smul.u32 %s276, 8
                %s279 = scalar_lea.vmem %s254, %s277
                %s280 = scalar_lea.vmem %s244, %s278 [#allocation5]
              $region49: #{tpu_custom_call.1} parent=43 // loop_footer
                %s266 = sadd.s32 %s264, 1
              $region50: #{tpu_custom_call.1} parent=43 // loop_footer_branch
                %263 = sbr.rel target = $region46
              $region51: #{tpu_custom_call.1} parent=43 // loop_exit
                _
            $region44: #{tpu_custom_call.1} parent=35 // pred_fallthru
              _
          $region36: #{tpu_custom_call.1} parent=31 // pred_fallthru
            _
          %303 = vnop
        $region32: #{tpu_custom_call.1} parent=23 // pred_fallthru
          _
      $region24: #{tpu_custom_call.1} parent=5 // pred_fallthru
        _
      %p304 = scmp.le.s32.totalorder 1, %s16
      %p305 = scmp.lt.s32.totalorder %s16, 3
      %p306 = pnand %p304, %p305
      %p307 = pneg %p306
      // Predicated region
      $region67: #{tpu_custom_call.1} parent=5 // pred_check
        _
      $region68: #{tpu_custom_call.1} parent=5 // pred_check_branch
        %309 = sbr.rel (%p306) target = $region70
      $region69: #{tpu_custom_call.1} parent=5 // pred_region
        %s310 = ssub.s32 %s16, 1
        %s311 = sand.u32 %s95, 1
        %s312 = scalar_lea.sflag [#allocation3], %s311
        %s313 = sand.u32 %s95, 1
        %s314 = smul.addr %s313, 32
        %s315 = scalar_lea.vmem [#allocation2], %s314
        // Predicated region
        $region71: #{tpu_custom_call.1} parent=69 // pred_check
          %p316 = pneg %p108
        $region72: #{tpu_custom_call.1} parent=69 // pred_check_branch
          %318 = sbr.rel (%p316) target = $region74
        $region73: #{tpu_custom_call.1} parent=69 // pred_region
          %319 = dma.done %s312, 512
        $region74: #{tpu_custom_call.1} parent=69 // pred_fallthru
          _
        %s320 = sand.u32 %s123, 1
        %s321 = sand.u32 %s123, 1
        %s322 = smul.addr %s321, 32
        %s323 = scalar_lea.vmem [#allocation5], %s322
        // Predicated region
        $region75: #{tpu_custom_call.1} parent=69 // pred_check
          %p324 = pneg %p136
        $region76: #{tpu_custom_call.1} parent=69 // pred_check_branch
          %326 = sbr.rel (%p324) target = $region78
        $region77: #{tpu_custom_call.1} parent=69 // pred_region
          _
        $region78: #{tpu_custom_call.1} parent=69 // pred_fallthru
          _
        %s327 = smul.u32 4, %s25
        %s328 = ssub.s32 1, %s327
        %s329 = smul.u32 32, %s328
        %p330 = scmp.lt.s32.totalorder %s327, 0
        %s331 = scalar_select %p330, %s327, 0
        %s332 = smul.addr %s331, 2
        %s333 = scalar_lea.vmem %s0, %s332
        %p334 = pneg %p54
        %p335 = pneg %p51
        %s336 = smul.u32 4, %s25
        %s337 = ssub.s32 1, %s336
        %s338 = smul.u32 32, %s337
        %p339 = scmp.lt.s32.totalorder %s336, 0
        %s340 = scalar_select %p339, %s336, 0
        %s341 = smul.addr %s340, 2
        %s342 = scalar_lea.vmem %s1, %s341
        %p343 = pneg %p80
        %p344 = pneg %p77
        %s345 = sand.u32 %s95, 1
        %s346 = scalar_lea.sflag [#allocation3], %s345
        %s347 = sand.u32 %s95, 1
        %s348 = smul.addr %s347, 32
        %s349 = scalar_lea.vmem [#allocation2], %s348
        %p350 = pneg %p108
        %p351 = pneg %p105
        %s352 = sand.u32 %s123, 1
        %s353 = sand.u32 %s123, 1
        %s354 = smul.addr %s353, 32
        %s355 = scalar_lea.vmem [#allocation5], %s354
        %p356 = pneg %p136
        %p357 = pneg %p133
        %p358 = pneg %p164
        %p359 = pneg %p161
        %s360 = sand.u32 %s151, 1
        %s361 = scalar_lea.sflag [#allocation4], %s360
        %s362 = sand.u32 %s151, 1
        %s363 = smul.addr %s362, 32
        %s364 = scalar_lea.vmem [#allocation6], %s363
        %s365 = smul.u32 4, %s25
        %s366 = ssub.s32 1, %s365
        %s367 = smul.u32 32, %s366
        %p368 = scmp.lt.s32.totalorder %s365, 0
        %s369 = scalar_select %p368, %s365, 0
        %s370 = smul.addr %s369, 2
        %s371 = scalar_lea.vmem %s0, %s370
        %s372 = smul.u32 4, %s25
        %s373 = ssub.s32 1, %s372
        %s374 = smul.u32 32, %s373
        %s375 = smul.u32 4, %s25
        %s376 = ssub.s32 1, %s375
        %s377 = smul.u32 32, %s376
        %p378 = scmp.lt.s32.totalorder %s375, 0
        %s379 = scalar_select %p378, %s375, 0
        %s380 = smul.addr %s379, 2
        %s381 = scalar_lea.vmem %s1, %s380
        %s382 = smul.u32 4, %s25
        %s383 = ssub.s32 1, %s382
        %s384 = smul.u32 32, %s383
        %s385 = smul.u32 4, %s25
        %s386 = smul.u32 4, %s26
        %s387 = ssub.s32 1, %s385
        %s388 = smul.u32 32, %s387
        %s389 = smul.u32 %s388, 4
        %s390 = smul.u32 4, %s25
        %s391 = smul.u32 4, %s26
        %s392 = ssub.s32 1, %s390
        %s393 = smul.u32 32, %s392
        %s394 = smul.u32 %s393, 4
        %s395 = smul.u32 4, %s25
        %s396 = smul.u32 4, %s26
        %s397 = ssub.s32 1, %s395
        %s398 = smul.u32 32, %s397
        %s399 = smul.u32 %s398, 4
        %v400 = vld [vmem:[%s371] sm:$0xff]
        %v401 = vld [vmem:[%s315] sm:$0xff]
        %v402 = vld [vmem:[%s315 + $0x8] sm:$0xff]
        %v403 = vld [vmem:[%s315 + $0x10] sm:$0xff]
        %v404 = vld [vmem:[%s315 + $0x18] sm:$0xff]
        %406 = vset.pattern.permute.xlu0 0
        %407 = vperm.xlu0 %406, %v400
        %v408 = vpop.permute.xlu0 %407
        %v414 = vcombine.low %v401, %v402
        %v415 = vcombine.high %v401, %v402
        %v416 = vcombine.low %v403, %v404
        %v417 = vcombine.high %v403, %v404
        %v419 = vunpack.c.l.s4 1983009808
        %v420 = vunpack.c.0.s8 %v419
        %v421 = vlaneseq
        %v422 = vshrl.u32 %v421, 7
        %v423 = vsub.s32 %v420, %v422
        %v424 = vrot.slane %v414, %v423
        %v426 = vunpack.c.l.s4 1983009808
        %v427 = vunpack.c.0.s8 %v426
        %v428 = vlaneseq
        %v429 = vshrl.u32 %v428, 7
        %v430 = vsub.s32 %v427, %v429
        %v431 = vrot.slane %v415, %v430
        %v433 = vunpack.c.l.s4 1983009808
        %v434 = vunpack.c.0.s8 %v433
        %v435 = vlaneseq
        %v436 = vshrl.u32 %v435, 7
        %v437 = vsub.s32 %v434, %v436
        %v438 = vrot.slane %v416, %v437
        %v440 = vunpack.c.l.s4 1983009808
        %v441 = vunpack.c.0.s8 %v440
        %v442 = vlaneseq
        %v443 = vshrl.u32 %v442, 7
        %v444 = vsub.s32 %v441, %v443
        %v445 = vrot.slane %v417, %v444
        %v446 = vcombine.low %v424, %v438
        %v447 = vcombine.high %v424, %v438
        %v448 = vcombine.low %v431, %v445
        %v449 = vcombine.high %v431, %v445
        %v454 = vmul.f32 %v408, %v446
        %v455 = vmul.f32 %v408, %v447
        %v456 = vmul.f32 %v408, %v448
        %v457 = vmul.f32 %v408, %v449
        %v458 = vld [vmem:[%s381] sm:$0xff]
        %v459 = vld [vmem:[%s323] sm:$0xff]
        %v460 = vld [vmem:[%s323 + $0x8] sm:$0xff]
        %v461 = vld [vmem:[%s323 + $0x10] sm:$0xff]
        %v462 = vld [vmem:[%s323 + $0x18] sm:$0xff]
        %464 = vset.pattern.permute.xlu0 0
        %465 = vperm.xlu0 %464, %v458
        %v466 = vpop.permute.xlu0 %465
        %v472 = vcombine.low %v459, %v460
        %v473 = vcombine.high %v459, %v460
        %v474 = vcombine.low %v461, %v462
        %v475 = vcombine.high %v461, %v462
        %v477 = vunpack.c.l.s4 1983009808
        %v478 = vunpack.c.0.s8 %v477
        %v479 = vlaneseq
        %v480 = vshrl.u32 %v479, 7
        %v481 = vsub.s32 %v478, %v480
        %v482 = vrot.slane %v472, %v481
        %v484 = vunpack.c.l.s4 1983009808
        %v485 = vunpack.c.0.s8 %v484
        %v486 = vlaneseq
        %v487 = vshrl.u32 %v486, 7
        %v488 = vsub.s32 %v485, %v487
        %v489 = vrot.slane %v473, %v488
        %v491 = vunpack.c.l.s4 1983009808
        %v492 = vunpack.c.0.s8 %v491
        %v493 = vlaneseq
        %v494 = vshrl.u32 %v493, 7
        %v495 = vsub.s32 %v492, %v494
        %v496 = vrot.slane %v474, %v495
        %v498 = vunpack.c.l.s4 1983009808
        %v499 = vunpack.c.0.s8 %v498
        %v500 = vlaneseq
        %v501 = vshrl.u32 %v500, 7
        %v502 = vsub.s32 %v499, %v501
        %v503 = vrot.slane %v475, %v502
        %v504 = vcombine.low %v482, %v496
        %v505 = vcombine.high %v482, %v496
        %v506 = vcombine.low %v489, %v503
        %v507 = vcombine.high %v489, %v503
        %v512 = vmul.f32 %v466, %v504
        %v513 = vmul.f32 %v466, %v505
        %v514 = vmul.f32 %v466, %v506
        %v515 = vmul.f32 %v466, %v507
        %v516 = vadd.f32 %v454, %v512
        %v517 = vadd.f32 %v455, %v513
        %v518 = vadd.f32 %v456, %v514
        %v519 = vadd.f32 %v457, %v515
        %v524 = vcombine.low %v516, %v517
        %v525 = vcombine.high %v516, %v517
        %v526 = vcombine.low %v518, %v519
        %v527 = vcombine.high %v518, %v519
        %v529 = vunpack.c.l.s4 1983009808
        %v530 = vunpack.c.0.s8 %v529
        %v531 = vlaneseq
        %v532 = vshrl.u32 %v531, 7
        %v533 = vsub.s32 %v530, %v532
        %v534 = vrot.slane %v524, %v533
        %v536 = vunpack.c.l.s4 1983009808
        %v537 = vunpack.c.0.s8 %v536
        %v538 = vlaneseq
        %v539 = vshrl.u32 %v538, 7
        %v540 = vsub.s32 %v537, %v539
        %v541 = vrot.slane %v525, %v540
        %v543 = vunpack.c.l.s4 1983009808
        %v544 = vunpack.c.0.s8 %v543
        %v545 = vlaneseq
        %v546 = vshrl.u32 %v545, 7
        %v547 = vsub.s32 %v544, %v546
        %v548 = vrot.slane %v526, %v547
        %v550 = vunpack.c.l.s4 1983009808
        %v551 = vunpack.c.0.s8 %v550
        %v552 = vlaneseq
        %v553 = vshrl.u32 %v552, 7
        %v554 = vsub.s32 %v551, %v553
        %v555 = vrot.slane %v527, %v554
        %v556 = vcombine.low %v534, %v548
        %v557 = vcombine.high %v534, %v548
        %v558 = vcombine.low %v541, %v555
        %v559 = vcombine.high %v541, %v555
        %564 = vst [vmem:[%s364] sm:$0xff] %v556
        %565 = vst [vmem:[%s364 + $0x8] sm:$0xff] %v557
        %566 = vst [vmem:[%s364 + $0x10] sm:$0xff] %v558
        %567 = vst [vmem:[%s364 + $0x18] sm:$0xff] %v559
        %s568 = sand.u32 %s151, 1
        %s569 = scalar_lea.sflag [#allocation4], %s568
        %s570 = sand.u32 %s151, 1
        %s571 = smul.addr %s570, 32
        %s572 = scalar_lea.vmem [#allocation6], %s571
        // Predicated region
        $region79: #{tpu_custom_call.1} parent=69 // pred_check
          %p573 = pneg %p161
        $region80: #{tpu_custom_call.1} parent=69 // pred_check_branch
          %575 = sbr.rel (%p573) target = $region82
        $region81: #{tpu_custom_call.1} parent=69 // pred_region
          %s576 = smul.u32 4, %s25
          %s577 = smul.u32 4, %s26
          %s578 = ssub.s32 1, %s576
          %s579 = smul.u32 32, %s578
          %s580 = smul.u32 %s579, 4
          %s582 = ssub.s32 512, %s580
          %583 = vsyncadd %s569, %s582
          %p584 = scmp.ne.s32.totalorder 0, %s580
          %s585 = smul.addr %s576, 8
          %s586 = sadd.s32 %s577, %s585
          %s587 = smul.addr %s586, 32
          %s588 = scalar_lea.hbm %s4, %s587
          %s589 = smul.u32 8, %s578
          %s590 = sshll.u32 %s572, 4
          %s591 = int_to_ptr.vmem [resolvable:$true] %s590
          %s592 = sshll.u32 %s589, 4
          %596 = dma.vmem_to_hbm [thread:$0]  (%p584), %s591, %s592, %s588, %s569, 128, 256, 8
        $region82: #{tpu_custom_call.1} parent=69 // pred_fallthru
          _
      $region70: #{tpu_custom_call.1} parent=5 // pred_fallthru
        _
      %p597 = scmp.le.s32.totalorder 2, %s16
      // Predicated region
      $region83: #{tpu_custom_call.1} parent=5 // pred_check
        %p598 = pneg %p597
      $region84: #{tpu_custom_call.1} parent=5 // pred_check_branch
        %600 = sbr.rel (%p598) target = $region86
      $region85: #{tpu_custom_call.1} parent=5 // pred_region
        %s601 = ssub.s32 %s16, 2
        // Predicated region
        $region87: #{tpu_custom_call.1} parent=85 // pred_check
          %p602 = pneg %p167
        $region88: #{tpu_custom_call.1} parent=85 // pred_check_branch
          %604 = sbr.rel (%p602) target = $region90
        $region89: #{tpu_custom_call.1} parent=85 // pred_region
          %s605 = sand.u32 %s152, 1
          %s606 = scalar_lea.sflag [#allocation4], %s605
          %s607 = sand.u32 %s152, 1
          %s608 = smul.addr %s607, 32
          %s609 = scalar_lea.vmem [#allocation6], %s608
          %610 = dma.done %s606, 512
        $region90: #{tpu_custom_call.1} parent=85 // pred_fallthru
          _
      $region86: #{tpu_custom_call.1} parent=5 // pred_fallthru
        _
    $region6: #{tpu_custom_call.1} parent=1 // loop_footer
      %s20 = sadd.s32 1, %s16
    $region7: #{tpu_custom_call.1} parent=1 // loop_footer_branch
      %15 = sbr.rel target = $region3
    $region8: #{tpu_custom_call.1} parent=1 // loop_exit
      _
    %611 = vsyncpa [#allocation3], 1
    %s612 = scalar_lea.sflag [#allocation3], 1
    %613 = vsyncpa %s612, 1
    %614 = vsyncpa [#allocation4], 1
    %s615 = scalar_lea.sflag [#allocation4], 1
    %616 = vsyncpa %s615, 1

</llo_original>
